<compile_context>
chip_gen: v5e
topology: v5e:2x2
jax: 0.10.0
libtpu: 0.0.40
codegen_flags: <defaults>
</compile_context>

<pallas_src>
import jax
import jax.numpy as jnp
from jax.experimental import pallas as pl
from jax.experimental.pallas import tpu as pltpu

_LANE = 128
_SUBLANE = 8


def _round_up(n: int, m: int) -> int:
    return ((n + m - 1) // m) * m


def value_net_kernel(x_ref, w1_ref, b1_ref, w2_ref, b2_ref, w3_ref, b3_ref, out_ref):
    """One batch tile: relu(x@W1+b1) -> relu(@W2+b2) -> @W3+b3, lane-packed output.

    Matmul operands are in the weight dtype (bf16 or f32); accumulation, bias adds
    and ReLU run in f32. Only column 0 of the third matmul is meaningful; it is
    packed into lanes (128 batch rows per output row) via a per-128-row transpose
    so the output block is a dense (1, TB/128, 128) slab instead of (TB, 128).
    """
    cdt = w1_ref.dtype
    x = x_ref[...].astype(cdt)   # f32 stream -> compute-dtype cast on the VPU (idle slots)

    h1 = jnp.dot(x, w1_ref[...], preferred_element_type=jnp.float32) + b1_ref[...]
    h1 = jnp.maximum(h1, 0.0).astype(cdt)

    h2 = jnp.dot(h1, w2_ref[...], preferred_element_type=jnp.float32) + b2_ref[...]
    h2 = jnp.maximum(h2, 0.0).astype(cdt)

    v = jnp.dot(h2, w3_ref[...], preferred_element_type=jnp.float32) + b3_ref[...]

    tb = v.shape[0]
    g = tb // _LANE
    # (TB, 128) -> (G, 128, 128), swap last two dims (XLU transpose), keep column 0:
    # packed[grp, lane] = value of local batch row grp*128 + lane.
    v_t = jnp.swapaxes(v.reshape(g, _LANE, _LANE), 1, 2)
    out_ref[0] = v_t[:, 0, :].astype(out_ref.dtype)        # (G, 128) lane-dense values


def value_network_forward(x, params, *, block_b: int = 2048, use_bf16: bool = True):
    """Pallas forward. x: (B, state_dim) f32. Returns (value (B, 1) f32, None)."""
    w1, b1, w2, b2, w3, b3 = params
    B, d_in = x.shape
    H = w1.shape[1]

    Hp = _round_up(H, _LANE)            # lane-aligned hidden width (zero-padded)
    Vp = _LANE                          # lane-aligned value-head width for the MXU

    compute_dtype = jnp.bfloat16 if use_bf16 else jnp.float32
    cbytes = jnp.dtype(compute_dtype).itemsize

    # Weight/bias padding is semantically neutral: zero cols + zero bias -> relu(0)=0;
    # extra value-head columns are discarded by the in-kernel lane pack.
    w1p = jnp.pad(w1, ((0, 0), (0, Hp - H))).astype(compute_dtype)
    b1p = jnp.pad(b1, ((0, 0), (0, Hp - H))).astype(jnp.float32)
    w2p = jnp.pad(w2, ((0, Hp - H), (0, Hp - H))).astype(compute_dtype)
    b2p = jnp.pad(b2, ((0, 0), (0, Hp - H))).astype(jnp.float32)
    w3p = jnp.pad(w3, ((0, Hp - H), (0, Vp - w3.shape[1]))).astype(compute_dtype)
    b3p = jnp.pad(b3, ((0, 0), (0, Vp - b3.shape[1]))).astype(jnp.float32)

    # Balanced batch tiling: grid = cdiv(B, block_b), TB = round_up(B/grid, 128).
    block_b = _round_up(max(int(block_b), _LANE), _LANE)
    grid_n = max(1, pl.cdiv(B, block_b))
    TB = _round_up(pl.cdiv(B, grid_n), _LANE)
    Bp = grid_n * TB
    G = TB // _LANE

    # x streams in as f32 (no wrapper-side cast pass); pad rows only if needed.
    xin = x if Bp == B else jnp.pad(x, ((0, Bp - B), (0, 0)))

    # VMEM budget: double-buffered x/out streams + (double-buffered) resident
    # weights + live f32/bf16 intermediates. Stays well under v7x's 64 MiB.
    x_tile_bytes = TB * d_in * 4
    out_tile_bytes = TB * 4
    weight_bytes = (w1p.size + w2p.size + w3p.size) * cbytes \
        + (b1p.size + b2p.size + b3p.size) * 4
    interm_bytes = TB * Hp * (2 * 4 + 2 * cbytes) + 2 * TB * Vp * 4
    vmem_needed = 2 * (x_tile_bytes + out_tile_bytes) + 2 * weight_bytes + interm_bytes
    vmem_limit = min(max(2 * vmem_needed, 4 << 20), 32 << 20)

    # Cost estimate: executed (padded) flops; streamed bytes = f32 x in, one-time
    # weights, packed f32 values out.
    flops = 2 * Bp * (d_in * Hp + Hp * Hp + Hp * Vp)
    bytes_accessed = Bp * d_in * 4 + weight_bytes + Bp * 4

    out = pl.pallas_call(
        value_net_kernel,
        out_shape=jax.ShapeDtypeStruct((grid_n, G, _LANE), jnp.float32),
        grid=(grid_n,),
        in_specs=[
            pl.BlockSpec((TB, d_in), lambda i: (i, 0)),   # streamed batch tile (f32)
            pl.BlockSpec(w1p.shape, lambda i: (0, 0)),    # VMEM-resident weights
            pl.BlockSpec(b1p.shape, lambda i: (0, 0)),
            pl.BlockSpec(w2p.shape, lambda i: (0, 0)),
            pl.BlockSpec(b2p.shape, lambda i: (0, 0)),
            pl.BlockSpec(w3p.shape, lambda i: (0, 0)),
            pl.BlockSpec(b3p.shape, lambda i: (0, 0)),
        ],
        out_specs=pl.BlockSpec((1, G, _LANE), lambda i: (i, 0, 0)),
        compiler_params=pltpu.CompilerParams(
            dimension_semantics=("parallel",),            # megacore-shard batch on v7x
            vmem_limit_bytes=int(vmem_limit),
        ),
        cost_estimate=pl.CostEstimate(
            flops=int(flops), transcendentals=0, bytes_accessed=int(bytes_accessed)),
    )(xin, w1p, b1p, w2p, b2p, w3p, b3p)

    # (grid, G, 128) lane-packed values: flattened index == batch row index.
    value = out.reshape(Bp)[:B].reshape(B, 1)
    # next_hidden_state is always None on the non-RNN path.
    return value, None


def init_value_network_params(key, state_dim, hidden_dim):
    """Deterministic init mimicking torch.nn.Linear default: U(-1/sqrt(fan_in), +)."""
    def linear(key, fan_in, fan_out):
        kw, kb = jax.random.split(key)
        bound = 1.0 / jnp.sqrt(fan_in)
        w = jax.random.uniform(kw, (fan_in, fan_out), jnp.float32, -bound, bound)
        b = jax.random.uniform(kb, (1, fan_out), jnp.float32, -bound, bound)
        return w, b

    k1, k2, k3 = jax.random.split(key, 3)
    w1, b1 = linear(k1, state_dim, hidden_dim)
    w2, b2 = linear(k2, hidden_dim, hidden_dim)
    w3, b3 = linear(k3, hidden_dim, 1)
    return (w1, b1, w2, b2, w3, b3)


def value_network_ref(x, params):
    """Pure-JAX f32 reference for correctness checking."""
    w1, b1, w2, b2, w3, b3 = params
    h1 = jnp.maximum(x @ w1 + b1, 0.0)
    h2 = jnp.maximum(h1 @ w2 + b2, 0.0)
    return h2 @ w3 + b3


if __name__ == "__main__":
    # Small shapes consistent with the module: batch=8, state_dim=16, hidden_dim=32.
    batch, state_dim, hidden_dim = 8, 16, 32

    key = jax.random.PRNGKey(0)
    k_params, k_in1, k_in2, k_in3 = jax.random.split(key, 4)
    params = init_value_network_params(k_params, state_dim, hidden_dim)

    # Test 1: default perf path (bf16 matmul operands, f32 accumulation), tiny batch.
    x = jax.random.normal(k_in1, (batch, state_dim), jnp.float32)
    value, next_hidden = value_network_forward(x, params, use_bf16=True)
    value = jax.block_until_ready(value)
    ref = value_network_ref(x, params)
    assert value.shape == (batch, 1), value.shape
    assert next_hidden is None
    assert jnp.allclose(value, ref, atol=5e-2, rtol=5e-2), (value, ref)

    # Test 2: pure f32, ragged batch (exercises row-padding path), tight tolerance.
    x2 = jax.random.normal(k_in2, (13, state_dim), jnp.float32)
    value2, _ = value_network_forward(x2, params, use_bf16=False)
    value2 = jax.block_until_ready(value2)
    ref2 = value_network_ref(x2, params)
    assert value2.shape == (13, 1), value2.shape
    assert jnp.allclose(value2, ref2, atol=1e-5, rtol=1e-5), (value2, ref2)

    # Test 3: pure f32, multi-step grid (grid=2) and multi-group lane packing (G=2),
    # exercising the packed-output layout across tiles.
    x3 = jax.random.normal(k_in3, (300, state_dim), jnp.float32)
    value3, _ = value_network_forward(x3, params, block_b=256, use_bf16=False)
    value3 = jax.block_until_ready(value3)
    ref3 = value_network_ref(x3, params)
    assert value3.shape == (300, 1), value3.shape
    assert jnp.allclose(value3, ref3, atol=1e-5, rtol=1e-5), (value3, ref3)

    print("KERNEL_OK")
</pallas_src>

<mosaic_0001>
module attributes {stable_mosaic.version = 11 : i64} {
  func.func @value_net_kernel(%arg0: i32, %arg1: memref<128x16xf32, #tpu.memory_space<vmem>>, %arg2: memref<16x128xbf16, #tpu.memory_space<vmem>>, %arg3: memref<1x128xf32, #tpu.memory_space<vmem>>, %arg4: memref<128x128xbf16, #tpu.memory_space<vmem>>, %arg5: memref<1x128xf32, #tpu.memory_space<vmem>>, %arg6: memref<128x128xbf16, #tpu.memory_space<vmem>>, %arg7: memref<1x128xf32, #tpu.memory_space<vmem>>, %arg8: memref<1x1x128xf32, #tpu.memory_space<vmem>>) attributes {dimension_semantics = [#tpu.dimension_semantics<parallel>], iteration_bounds = array<i64: 1>, scalar_prefetch = 0 : i64, scratch_operands = 0 : i64, tpu.core_type = #tpu.core_type<tc>, window_params = [{transform_indices = @transform_0, window_bounds = array<i64: 128, 16>}, {pipeline_mode = #tpu.pipeline_mode<synchronous>, transform_indices = @transform_1, window_bounds = array<i64: 16, 128>}, {pipeline_mode = #tpu.pipeline_mode<synchronous>, transform_indices = @transform_2, window_bounds = array<i64: 1, 128>}, {pipeline_mode = #tpu.pipeline_mode<synchronous>, transform_indices = @transform_3, window_bounds = array<i64: 128, 128>}, {pipeline_mode = #tpu.pipeline_mode<synchronous>, transform_indices = @transform_4, window_bounds = array<i64: 1, 128>}, {pipeline_mode = #tpu.pipeline_mode<synchronous>, transform_indices = @transform_5, window_bounds = array<i64: 128, 128>}, {pipeline_mode = #tpu.pipeline_mode<synchronous>, transform_indices = @transform_6, window_bounds = array<i64: 1, 128>}, {transform_indices = @transform_7, window_bounds = array<i64: 1, 1, 128>}]} {
    %c0 = arith.constant 0 : index
    %c0_0 = arith.constant 0 : index
    %0 = vector.load %arg1[%c0, %c0_0] : memref<128x16xf32, #tpu.memory_space<vmem>>, vector<128x16xf32>
    %1 = arith.truncf %0 : vector<128x16xf32> to vector<128x16xbf16>
    %c0_1 = arith.constant 0 : index
    %c0_2 = arith.constant 0 : index
    %2 = vector.load %arg2[%c0_1, %c0_2] : memref<16x128xbf16, #tpu.memory_space<vmem>>, vector<16x128xbf16>
    %cst = arith.constant dense<0.000000e+00> : vector<128x128xf32>
    %3 = tpu.matmul %1, %2, %cst {dimension_numbers = #tpu.dot_dimension_numbers<[1], [0], [0], [1], [0, 0, 1, 1], [], []>} : vector<128x16xbf16>, vector<16x128xbf16>, vector<128x128xf32> -> vector<128x128xf32>
    %c0_3 = arith.constant 0 : index
    %c0_4 = arith.constant 0 : index
    %4 = vector.load %arg3[%c0_3, %c0_4] : memref<1x128xf32, #tpu.memory_space<vmem>>, vector<1x128xf32>
    %5 = vector.broadcast %4 : vector<1x128xf32> to vector<128x128xf32>
    %6 = arith.addf %3, %5 : vector<128x128xf32>
    %cst_5 = arith.constant 0.000000e+00 : f32
    %7 = vector.broadcast %cst_5 : f32 to vector<128x128xf32>
    %8 = arith.maximumf %6, %7 : vector<128x128xf32>
    %9 = arith.truncf %8 : vector<128x128xf32> to vector<128x128xbf16>
    %c0_6 = arith.constant 0 : index
    %c0_7 = arith.constant 0 : index
    %10 = vector.load %arg4[%c0_6, %c0_7] : memref<128x128xbf16, #tpu.memory_space<vmem>>, vector<128x128xbf16>
    %cst_8 = arith.constant dense<0.000000e+00> : vector<128x128xf32>
    %11 = tpu.matmul %9, %10, %cst_8 {dimension_numbers = #tpu.dot_dimension_numbers<[1], [0], [0], [1], [0, 0, 1, 1], [], []>} : vector<128x128xbf16>, vector<128x128xbf16>, vector<128x128xf32> -> vector<128x128xf32>
    %c0_9 = arith.constant 0 : index
    %c0_10 = arith.constant 0 : index
    %12 = vector.load %arg5[%c0_9, %c0_10] : memref<1x128xf32, #tpu.memory_space<vmem>>, vector<1x128xf32>
    %13 = vector.broadcast %12 : vector<1x128xf32> to vector<128x128xf32>
    %14 = arith.addf %11, %13 : vector<128x128xf32>
    %cst_11 = arith.constant 0.000000e+00 : f32
    %15 = vector.broadcast %cst_11 : f32 to vector<128x128xf32>
    %16 = arith.maximumf %14, %15 : vector<128x128xf32>
    %17 = arith.truncf %16 : vector<128x128xf32> to vector<128x128xbf16>
    %c0_12 = arith.constant 0 : index
    %c0_13 = arith.constant 0 : index
    %18 = vector.load %arg6[%c0_12, %c0_13] : memref<128x128xbf16, #tpu.memory_space<vmem>>, vector<128x128xbf16>
    %cst_14 = arith.constant dense<0.000000e+00> : vector<128x128xf32>
    %19 = tpu.matmul %17, %18, %cst_14 {dimension_numbers = #tpu.dot_dimension_numbers<[1], [0], [0], [1], [0, 0, 1, 1], [], []>} : vector<128x128xbf16>, vector<128x128xbf16>, vector<128x128xf32> -> vector<128x128xf32>
    %c0_15 = arith.constant 0 : index
    %c0_16 = arith.constant 0 : index
    %20 = vector.load %arg7[%c0_15, %c0_16] : memref<1x128xf32, #tpu.memory_space<vmem>>, vector<1x128xf32>
    %21 = vector.broadcast %20 : vector<1x128xf32> to vector<128x128xf32>
    %22 = arith.addf %19, %21 : vector<128x128xf32>
    %23 = vector.shape_cast %22 : vector<128x128xf32> to vector<1x128x128xf32>
    %24 = tpu.transpose %23, [0, 2, 1] : vector<1x128x128xf32> -> vector<1x128x128xf32>
    %25 = vector.extract_strided_slice %24 {offsets = [0, 0, 0], sizes = [1, 1, 128], strides = [1, 1, 1]} : vector<1x128x128xf32> to vector<1x1x128xf32>
    %26 = vector.shape_cast %25 : vector<1x1x128xf32> to vector<1x128xf32>
    %c0_17 = arith.constant 0 : index
    %c0_18 = arith.constant 0 : index
    %c0_19 = arith.constant 0 : index
    %27 = vector.load %arg8[%c0_17, %c0_18, %c0_19] : memref<1x1x128xf32, #tpu.memory_space<vmem>>, vector<1x1x128xf32>
    %28 = vector.shape_cast %27 : vector<1x1x128xf32> to vector<1x128xf32>
    %29 = vector.shape_cast %26 : vector<1x128xf32> to vector<1x1x128xf32>
    tpu.vector_store %arg8[%c0_17, %c0_18, %c0_19], %29 {strides = array<i32>} : memref<1x1x128xf32, #tpu.memory_space<vmem>>, vector<1x1x128xf32>,
    return
  }
  func.func @transform_0(%arg0: i32) -> (i32, i32) {
    %c0_i32 = arith.constant 0 : i32
    %c0_i32_0 = arith.constant 0 : i32
    return %arg0, %c0_i32 : i32, i32
  }
  func.func @transform_1(%arg0: i32) -> (i32, i32) {
    %c0_i32 = arith.constant 0 : i32
    %c0_i32_0 = arith.constant 0 : i32
    %c0_i32_1 = arith.constant 0 : i32
    return %c0_i32, %c0_i32_0 : i32, i32
  }
  func.func @transform_2(%arg0: i32) -> (i32, i32) {
    %c0_i32 = arith.constant 0 : i32
    %c0_i32_0 = arith.constant 0 : i32
    %c0_i32_1 = arith.constant 0 : i32
    return %c0_i32, %c0_i32_0 : i32, i32
  }
  func.func @transform_3(%arg0: i32) -> (i32, i32) {
    %c0_i32 = arith.constant 0 : i32
    %c0_i32_0 = arith.constant 0 : i32
    %c0_i32_1 = arith.constant 0 : i32
    return %c0_i32, %c0_i32_0 : i32, i32
  }
  func.func @transform_4(%arg0: i32) -> (i32, i32) {
    %c0_i32 = arith.constant 0 : i32
    %c0_i32_0 = arith.constant 0 : i32
    %c0_i32_1 = arith.constant 0 : i32
    return %c0_i32, %c0_i32_0 : i32, i32
  }
  func.func @transform_5(%arg0: i32) -> (i32, i32) {
    %c0_i32 = arith.constant 0 : i32
    %c0_i32_0 = arith.constant 0 : i32
    %c0_i32_1 = arith.constant 0 : i32
    return %c0_i32, %c0_i32_0 : i32, i32
  }
  func.func @transform_6(%arg0: i32) -> (i32, i32) {
    %c0_i32 = arith.constant 0 : i32
    %c0_i32_0 = arith.constant 0 : i32
    %c0_i32_1 = arith.constant 0 : i32
    return %c0_i32, %c0_i32_0 : i32, i32
  }
  func.func @transform_7(%arg0: i32) -> (i32, i32, i32) {
    %c0_i32 = arith.constant 0 : i32
    %c0_i32_0 = arith.constant 0 : i32
    %c0_i32_1 = arith.constant 0 : i32
    return %arg0, %c0_i32, %c0_i32_0 : i32, i32, i32
  }
}

</mosaic_0001>

<llo_original>
// kernel: tpu_custom_call.1
$region0: #{tpu_custom_call.1}
  #allocation0 [shape = 'u32[]', space=smem, size = 0x4, offset = 0x4, fixed_abs, tag = 'smem constant byte address 0x4 - core index']
  #allocation1 [shape = 'u32[72,128]{1,0:T(1,128)}', space=vmem, size = 0x9000, scoped, tag = 'internal scratch']
  %s0 = inlined_call_operand.vmem [shape: f32[128,16], index: 0, kind: input, shape index: {}]
  %s1 = inlined_call_operand.vmem [shape: bf16[16,128], index: 1, kind: input, shape index: {}]
  %s2 = inlined_call_operand.vmem [shape: f32[1,128], index: 2, kind: input, shape index: {}]
  %s3 = inlined_call_operand.vmem [shape: bf16[128,128], index: 3, kind: input, shape index: {}]
  %s4 = inlined_call_operand.vmem [shape: f32[1,128], index: 4, kind: input, shape index: {}]
  %s5 = inlined_call_operand.vmem [shape: bf16[128,128], index: 5, kind: input, shape index: {}]
  %s6 = inlined_call_operand.vmem [shape: f32[1,128], index: 6, kind: input, shape index: {}]
  %s7 = inlined_call_operand.hbm [shape: f32[1,1,128], index: 7, kind: output, shape index: {}]
  %s8 = sld [smem:[#allocation0]]
  $region38: #{tpu_custom_call.1} parent=0
    _
  %s10 = ssub.s32 1, %s8
  %s11 = scalar_select 0, %s10, %s8
  $region1: #{tpu_custom_call.1} parent=0
    #allocation2 [shape = 'u8[512]{0}', space=vmem, size = 0x400, scoped, tag = 'output window, operand 0, single buffered']
    #allocation3 [shape = 's32[1]{0}', space=sflag, size = 0x4, scoped, tag = 'scoped memory for tpu_custom_call.1']
    %12 = vsyncpa [#allocation3], 0
    // Predicated region
    $region2: #{tpu_custom_call.1} parent=1 // pred_check
      _
    $region3: #{tpu_custom_call.1} parent=1 // pred_check_branch
      %14 = sbr.rel (0) target = $region5
    $region4: #{tpu_custom_call.1} parent=1 // pred_region
      _
    $region5: #{tpu_custom_call.1} parent=1 // pred_fallthru
      _
    // Predicated region
    $region6: #{tpu_custom_call.1} parent=1 // pred_check
      _
    $region7: #{tpu_custom_call.1} parent=1 // pred_check_branch
      %16 = sbr.rel (0) target = $region9
    $region8: #{tpu_custom_call.1} parent=1 // pred_region
      _
    $region9: #{tpu_custom_call.1} parent=1 // pred_fallthru
      _
    // Predicated region
    $region10: #{tpu_custom_call.1} parent=1 // pred_check
      _
    $region11: #{tpu_custom_call.1} parent=1 // pred_check_branch
      %18 = sbr.rel (0) target = $region13
    $region12: #{tpu_custom_call.1} parent=1 // pred_region
      _
    $region13: #{tpu_custom_call.1} parent=1 // pred_fallthru
      _
    // Predicated region
    $region14: #{tpu_custom_call.1} parent=1 // pred_check
      _
    $region15: #{tpu_custom_call.1} parent=1 // pred_check_branch
      %20 = sbr.rel (0) target = $region17
    $region16: #{tpu_custom_call.1} parent=1 // pred_region
      _
    $region17: #{tpu_custom_call.1} parent=1 // pred_fallthru
      _
    // Predicated region
    $region18: #{tpu_custom_call.1} parent=1 // pred_check
      _
    $region19: #{tpu_custom_call.1} parent=1 // pred_check_branch
      %22 = sbr.rel (0) target = $region21
    $region20: #{tpu_custom_call.1} parent=1 // pred_region
      _
    $region21: #{tpu_custom_call.1} parent=1 // pred_fallthru
      _
    // Predicated region
    $region22: #{tpu_custom_call.1} parent=1 // pred_check
      _
    $region23: #{tpu_custom_call.1} parent=1 // pred_check_branch
      %24 = sbr.rel (0) target = $region25
    $region24: #{tpu_custom_call.1} parent=1 // pred_region
      _
    $region25: #{tpu_custom_call.1} parent=1 // pred_fallthru
      _
    // Predicated region
    $region26: #{tpu_custom_call.1} parent=1 // pred_check
      _
    $region27: #{tpu_custom_call.1} parent=1 // pred_check_branch
      %26 = sbr.rel (0) target = $region29
    $region28: #{tpu_custom_call.1} parent=1 // pred_region
      _
    $region29: #{tpu_custom_call.1} parent=1 // pred_fallthru
      _
    %v28 = vld [vmem:[%s0] sm:$0xff]
    %v29 = vld [vmem:[%s0 + $0x8] sm:$0xff]
    %v30 = vld [vmem:[%s0 + $0x10] sm:$0xff]
    %v31 = vld [vmem:[%s0 + $0x18] sm:$0xff]
    %v32 = vld [vmem:[%s0 + $0x20] sm:$0xff]
    %v33 = vld [vmem:[%s0 + $0x28] sm:$0xff]
    %v34 = vld [vmem:[%s0 + $0x30] sm:$0xff]
    %v35 = vld [vmem:[%s0 + $0x38] sm:$0xff]
    %v36 = vld [vmem:[%s0 + $0x40] sm:$0xff]
    %v37 = vld [vmem:[%s0 + $0x48] sm:$0xff]
    %v38 = vld [vmem:[%s0 + $0x50] sm:$0xff]
    %v39 = vld [vmem:[%s0 + $0x58] sm:$0xff]
    %v40 = vld [vmem:[%s0 + $0x60] sm:$0xff]
    %v41 = vld [vmem:[%s0 + $0x68] sm:$0xff]
    %v42 = vld [vmem:[%s0 + $0x70] sm:$0xff]
    %v43 = vld [vmem:[%s0 + $0x78] sm:$0xff]
    %v44 = vpack.c.bf16 %v29, %v28
    %v45 = vpack.c.bf16 %v31, %v30
    %v46 = vpack.c.bf16 %v33, %v32
    %v47 = vpack.c.bf16 %v35, %v34
    %v48 = vpack.c.bf16 %v37, %v36
    %v49 = vpack.c.bf16 %v39, %v38
    %v50 = vpack.c.bf16 %v41, %v40
    %v51 = vpack.c.bf16 %v43, %v42
    %v52 = vld [vmem:[%s1] sm:$0xf]
    %v53 = vld [vmem:[%s1 + $0x4] sm:$0xf]
    %v54 = vld [vmem:[%s2] sm:$0x1]
    %v56 = vperm.slane %v54, 0
    %v60 = vunpack.c.l.b16 %v52
    %v61 = vunpack.c.l.b16 %v53
    %v62 = vpack.c.b16 %v61, %v60
    %vm64 = vcmask 130048
    %v66 = vsel %vm64, %v44, 0
    %v69 = vsel %vm64, %v45, 0
    %v72 = vsel %vm64, %v46, 0
    %v75 = vsel %vm64, %v47, 0
    %v78 = vsel %vm64, %v48, 0
    %v81 = vsel %vm64, %v49, 0
    %v84 = vsel %vm64, %v50, 0
    %v87 = vsel %vm64, %v51, 0
    %89 = vmatpush.bf16.msra.mxu0 0
    %90 = vmatpush.bf16.msra.mxu0 0
    %91 = vmatpush.bf16.msra.mxu0 0
    %92 = vmatpush.bf16.msra.mxu0 0
    %93 = vmatpush.bf16.msra.mxu0 0
    %94 = vmatpush.bf16.msra.mxu0 0
    %95 = vmatpush.bf16.msra.mxu0 0
    %96 = vmatpush.bf16.msra.mxu0 %v62
    %97 = vmatmul.bf16.gmra.mxu0 %v66
    %v98 = vpop.f32.mrf.mxu0
    %v99 = vadd.f32 %v56, %v98
    %v100 = vpop.f32.mrf.mxu0
    %v101 = vadd.f32 %v56, %v100
    %102 = vmatmul.bf16.gmra.mxu0 %v69
    %v103 = vpop.f32.mrf.mxu0
    %v104 = vadd.f32 %v56, %v103
    %v105 = vpop.f32.mrf.mxu0
    %v106 = vadd.f32 %v56, %v105
    %107 = vmatmul.bf16.gmra.mxu0 %v72
    %v108 = vpop.f32.mrf.mxu0
    %v109 = vadd.f32 %v56, %v108
    %v110 = vpop.f32.mrf.mxu0
    %v111 = vadd.f32 %v56, %v110
    %112 = vmatmul.bf16.gmra.mxu0 %v75
    %v113 = vpop.f32.mrf.mxu0
    %v114 = vadd.f32 %v56, %v113
    %v115 = vpop.f32.mrf.mxu0
    %v116 = vadd.f32 %v56, %v115
    %117 = vmatmul.bf16.gmra.mxu0 %v78
    %v118 = vpop.f32.mrf.mxu0
    %v119 = vadd.f32 %v56, %v118
    %v120 = vpop.f32.mrf.mxu0
    %v121 = vadd.f32 %v56, %v120
    %122 = vmatmul.bf16.gmra.mxu0 %v81
    %v123 = vpop.f32.mrf.mxu0
    %v124 = vadd.f32 %v56, %v123
    %v125 = vpop.f32.mrf.mxu0
    %v126 = vadd.f32 %v56, %v125
    %127 = vmatmul.bf16.gmra.mxu0 %v84
    %v128 = vpop.f32.mrf.mxu0
    %v129 = vadd.f32 %v56, %v128
    %v130 = vpop.f32.mrf.mxu0
    %v131 = vadd.f32 %v56, %v130
    %132 = vmatmul.bf16.gmra.mxu0 %v87
    %v133 = vpop.f32.mrf.mxu0
    %v134 = vadd.f32 %v56, %v133
    %v135 = vpop.f32.mrf.mxu0
    %v136 = vadd.f32 %v56, %v135
    %137 = vdwg.mxu0
    %v138 = vmax.f32 %v99, 0.0
    %v139 = vmax.f32 %v101, 0.0
    %v140 = vmax.f32 %v104, 0.0
    %v141 = vmax.f32 %v106, 0.0
    %v142 = vmax.f32 %v109, 0.0
    %v143 = vmax.f32 %v111, 0.0
    %v144 = vmax.f32 %v114, 0.0
    %v145 = vmax.f32 %v116, 0.0
    %v146 = vmax.f32 %v119, 0.0
    %v147 = vmax.f32 %v121, 0.0
    %v148 = vmax.f32 %v124, 0.0
    %v149 = vmax.f32 %v126, 0.0
    %v150 = vmax.f32 %v129, 0.0
    %v151 = vmax.f32 %v131, 0.0
    %v152 = vmax.f32 %v134, 0.0
    %v153 = vmax.f32 %v136, 0.0
    %v154 = vpack.c.bf16 %v139, %v138
    %v155 = vpack.c.bf16 %v141, %v140
    %v156 = vpack.c.bf16 %v143, %v142
    %v157 = vpack.c.bf16 %v145, %v144
    %v158 = vpack.c.bf16 %v147, %v146
    %v159 = vpack.c.bf16 %v149, %v148
    %v160 = vpack.c.bf16 %v151, %v150
    %v161 = vpack.c.bf16 %v153, %v152
    %v162 = vld [vmem:[%s3] sm:$0xf]
    %v163 = vld [vmem:[%s3 + $0x4] sm:$0xf]
    %v164 = vld [vmem:[%s3 + $0x8] sm:$0xf]
    %v165 = vld [vmem:[%s3 + $0xc] sm:$0xf]
    %v166 = vld [vmem:[%s3 + $0x10] sm:$0xf]
    %v167 = vld [vmem:[%s3 + $0x14] sm:$0xf]
    %v168 = vld [vmem:[%s3 + $0x18] sm:$0xf]
    %v169 = vld [vmem:[%s3 + $0x1c] sm:$0xf]
    %v170 = vld [vmem:[%s3 + $0x20] sm:$0xf]
    %v171 = vld [vmem:[%s3 + $0x24] sm:$0xf]
    %v172 = vld [vmem:[%s3 + $0x28] sm:$0xf]
    %v173 = vld [vmem:[%s3 + $0x2c] sm:$0xf]
    %v174 = vld [vmem:[%s3 + $0x30] sm:$0xf]
    %v175 = vld [vmem:[%s3 + $0x34] sm:$0xf]
    %v176 = vld [vmem:[%s3 + $0x38] sm:$0xf]
    %v177 = vld [vmem:[%s3 + $0x3c] sm:$0xf]
    %v178 = vld [vmem:[%s4] sm:$0x1]
    %v180 = vperm.slane %v178, 0
    %v198 = vunpack.c.l.b16 %v162
    %v199 = vunpack.c.l.b16 %v163
    %v200 = vunpack.c.l.b16 %v164
    %v201 = vunpack.c.l.b16 %v165
    %v202 = vunpack.c.l.b16 %v166
    %v203 = vunpack.c.l.b16 %v167
    %v204 = vunpack.c.l.b16 %v168
    %v205 = vunpack.c.l.b16 %v169
    %v206 = vunpack.c.l.b16 %v170
    %v207 = vunpack.c.l.b16 %v171
    %v208 = vunpack.c.l.b16 %v172
    %v209 = vunpack.c.l.b16 %v173
    %v210 = vunpack.c.l.b16 %v174
    %v211 = vunpack.c.l.b16 %v175
    %v212 = vunpack.c.l.b16 %v176
    %v213 = vunpack.c.l.b16 %v177
    %v214 = vpack.c.b16 %v199, %v198
    %v215 = vpack.c.b16 %v201, %v200
    %v216 = vpack.c.b16 %v203, %v202
    %v217 = vpack.c.b16 %v205, %v204
    %v218 = vpack.c.b16 %v207, %v206
    %v219 = vpack.c.b16 %v209, %v208
    %v220 = vpack.c.b16 %v211, %v210
    %v221 = vpack.c.b16 %v213, %v212
    %230 = vmatpush.bf16.msra.mxu0 %v221
    %231 = vmatpush.bf16.msra.mxu0 %v220
    %232 = vmatpush.bf16.msra.mxu0 %v219
    %233 = vmatpush.bf16.msra.mxu0 %v218
    %234 = vmatpush.bf16.msra.mxu0 %v217
    %235 = vmatpush.bf16.msra.mxu0 %v216
    %236 = vmatpush.bf16.msra.mxu0 %v215
    %237 = vmatpush.bf16.msra.mxu0 %v214
    %238 = vmatmul.bf16.gmra.mxu0 %v154
    %v239 = vpop.f32.mrf.mxu0
    %v240 = vadd.f32 %v180, %v239
    %v241 = vpop.f32.mrf.mxu0
    %v242 = vadd.f32 %v180, %v241
    %243 = vmatmul.bf16.gmra.mxu0 %v155
    %v244 = vpop.f32.mrf.mxu0
    %v245 = vadd.f32 %v180, %v244
    %v246 = vpop.f32.mrf.mxu0
    %v247 = vadd.f32 %v180, %v246
    %248 = vmatmul.bf16.gmra.mxu0 %v156
    %v249 = vpop.f32.mrf.mxu0
    %v250 = vadd.f32 %v180, %v249
    %v251 = vpop.f32.mrf.mxu0
    %v252 = vadd.f32 %v180, %v251
    %253 = vmatmul.bf16.gmra.mxu0 %v157
    %v254 = vpop.f32.mrf.mxu0
    %v255 = vadd.f32 %v180, %v254
    %v256 = vpop.f32.mrf.mxu0
    %v257 = vadd.f32 %v180, %v256
    %258 = vmatmul.bf16.gmra.mxu0 %v158
    %v259 = vpop.f32.mrf.mxu0
    %v260 = vadd.f32 %v180, %v259
    %v261 = vpop.f32.mrf.mxu0
    %v262 = vadd.f32 %v180, %v261
    %263 = vmatmul.bf16.gmra.mxu0 %v159
    %v264 = vpop.f32.mrf.mxu0
    %v265 = vadd.f32 %v180, %v264
    %v266 = vpop.f32.mrf.mxu0
    %v267 = vadd.f32 %v180, %v266
    %268 = vmatmul.bf16.gmra.mxu0 %v160
    %v269 = vpop.f32.mrf.mxu0
    %v270 = vadd.f32 %v180, %v269
    %v271 = vpop.f32.mrf.mxu0
    %v272 = vadd.f32 %v180, %v271
    %273 = vmatmul.bf16.gmra.mxu0 %v161
    %v274 = vpop.f32.mrf.mxu0
    %v275 = vadd.f32 %v180, %v274
    %v276 = vpop.f32.mrf.mxu0
    %v277 = vadd.f32 %v180, %v276
    %278 = vdwg.mxu0
    %v279 = vmax.f32 %v240, 0.0
    %v280 = vmax.f32 %v242, 0.0
    %v281 = vmax.f32 %v245, 0.0
    %v282 = vmax.f32 %v247, 0.0
    %v283 = vmax.f32 %v250, 0.0
    %v284 = vmax.f32 %v252, 0.0
    %v285 = vmax.f32 %v255, 0.0
    %v286 = vmax.f32 %v257, 0.0
    %v287 = vmax.f32 %v260, 0.0
    %v288 = vmax.f32 %v262, 0.0
    %v289 = vmax.f32 %v265, 0.0
    %v290 = vmax.f32 %v267, 0.0
    %v291 = vmax.f32 %v270, 0.0
    %v292 = vmax.f32 %v272, 0.0
    %v293 = vmax.f32 %v275, 0.0
    %v294 = vmax.f32 %v277, 0.0
    %v295 = vpack.c.bf16 %v280, %v279
    %v296 = vpack.c.bf16 %v282, %v281
    %v297 = vpack.c.bf16 %v284, %v283
    %v298 = vpack.c.bf16 %v286, %v285
    %v299 = vpack.c.bf16 %v288, %v287
    %v300 = vpack.c.bf16 %v290, %v289
    %v301 = vpack.c.bf16 %v292, %v291
    %v302 = vpack.c.bf16 %v294, %v293
    %v303 = vld [vmem:[%s5] sm:$0xf]
    %v304 = vld [vmem:[%s5 + $0x4] sm:$0xf]
    %v305 = vld [vmem:[%s5 + $0x8] sm:$0xf]
    %v306 = vld [vmem:[%s5 + $0xc] sm:$0xf]
    %v307 = vld [vmem:[%s5 + $0x10] sm:$0xf]
    %v308 = vld [vmem:[%s5 + $0x14] sm:$0xf]
    %v309 = vld [vmem:[%s5 + $0x18] sm:$0xf]
    %v310 = vld [vmem:[%s5 + $0x1c] sm:$0xf]
    %v311 = vld [vmem:[%s5 + $0x20] sm:$0xf]
    %v312 = vld [vmem:[%s5 + $0x24] sm:$0xf]
    %v313 = vld [vmem:[%s5 + $0x28] sm:$0xf]
    %v314 = vld [vmem:[%s5 + $0x2c] sm:$0xf]
    %v315 = vld [vmem:[%s5 + $0x30] sm:$0xf]
    %v316 = vld [vmem:[%s5 + $0x34] sm:$0xf]
    %v317 = vld [vmem:[%s5 + $0x38] sm:$0xf]
    %v318 = vld [vmem:[%s5 + $0x3c] sm:$0xf]
    %v319 = vld [vmem:[%s6] sm:$0x1]
    %v321 = vperm.slane %v319, 0
    %v339 = vunpack.c.l.b16 %v303
    %v340 = vunpack.c.l.b16 %v304
    %v341 = vunpack.c.l.b16 %v305
    %v342 = vunpack.c.l.b16 %v306
    %v343 = vunpack.c.l.b16 %v307
    %v344 = vunpack.c.l.b16 %v308
    %v345 = vunpack.c.l.b16 %v309
    %v346 = vunpack.c.l.b16 %v310
    %v347 = vunpack.c.l.b16 %v311
    %v348 = vunpack.c.l.b16 %v312
    %v349 = vunpack.c.l.b16 %v313
    %v350 = vunpack.c.l.b16 %v314
    %v351 = vunpack.c.l.b16 %v315
    %v352 = vunpack.c.l.b16 %v316
    %v353 = vunpack.c.l.b16 %v317
    %v354 = vunpack.c.l.b16 %v318
    %v355 = vpack.c.b16 %v340, %v339
    %v356 = vpack.c.b16 %v342, %v341
    %v357 = vpack.c.b16 %v344, %v343
    %v358 = vpack.c.b16 %v346, %v345
    %v359 = vpack.c.b16 %v348, %v347
    %v360 = vpack.c.b16 %v350, %v349
    %v361 = vpack.c.b16 %v352, %v351
    %v362 = vpack.c.b16 %v354, %v353
    %371 = vmatpush.bf16.msra.mxu0 %v362
    %372 = vmatpush.bf16.msra.mxu0 %v361
    %373 = vmatpush.bf16.msra.mxu0 %v360
    %374 = vmatpush.bf16.msra.mxu0 %v359
    %375 = vmatpush.bf16.msra.mxu0 %v358
    %376 = vmatpush.bf16.msra.mxu0 %v357
    %377 = vmatpush.bf16.msra.mxu0 %v356
    %378 = vmatpush.bf16.msra.mxu0 %v355
    %379 = vmatmul.bf16.gmra.mxu0 %v295
    %v380 = vpop.f32.mrf.mxu0
    %v381 = vadd.f32 %v321, %v380
    %v382 = vpop.f32.mrf.mxu0
    %v383 = vadd.f32 %v321, %v382
    %384 = vmatmul.bf16.gmra.mxu0 %v296
    %v385 = vpop.f32.mrf.mxu0
    %v386 = vadd.f32 %v321, %v385
    %v387 = vpop.f32.mrf.mxu0
    %v388 = vadd.f32 %v321, %v387
    %389 = vmatmul.bf16.gmra.mxu0 %v297
    %v390 = vpop.f32.mrf.mxu0
    %v391 = vadd.f32 %v321, %v390
    %v392 = vpop.f32.mrf.mxu0
    %v393 = vadd.f32 %v321, %v392
    %394 = vmatmul.bf16.gmra.mxu0 %v298
    %v395 = vpop.f32.mrf.mxu0
    %v396 = vadd.f32 %v321, %v395
    %v397 = vpop.f32.mrf.mxu0
    %v398 = vadd.f32 %v321, %v397
    %399 = vmatmul.bf16.gmra.mxu0 %v299
    %v400 = vpop.f32.mrf.mxu0
    %v401 = vadd.f32 %v321, %v400
    %v402 = vpop.f32.mrf.mxu0
    %v403 = vadd.f32 %v321, %v402
    %404 = vmatmul.bf16.gmra.mxu0 %v300
    %v405 = vpop.f32.mrf.mxu0
    %v406 = vadd.f32 %v321, %v405
    %v407 = vpop.f32.mrf.mxu0
    %v408 = vadd.f32 %v321, %v407
    %409 = vmatmul.bf16.gmra.mxu0 %v301
    %v410 = vpop.f32.mrf.mxu0
    %v411 = vadd.f32 %v321, %v410
    %v412 = vpop.f32.mrf.mxu0
    %v413 = vadd.f32 %v321, %v412
    %414 = vmatmul.bf16.gmra.mxu0 %v302
    %v415 = vpop.f32.mrf.mxu0
    %v416 = vadd.f32 %v321, %v415
    %v417 = vpop.f32.mrf.mxu0
    %v418 = vadd.f32 %v321, %v417
    %419 = vdwg.mxu0
    %420 = vxpose.xlu0.b32.start [1/16] %v381, 128
    %421 = vxpose.xlu0.b32.cont [2/16] %v383, 128
    %422 = vxpose.xlu0.b32.cont [3/16] %v386, 128
    %423 = vxpose.xlu0.b32.cont [4/16] %v388, 128
    %424 = vxpose.xlu0.b32.cont [5/16] %v391, 128
    %425 = vxpose.xlu0.b32.cont [6/16] %v393, 128
    %426 = vxpose.xlu0.b32.cont [7/16] %v396, 128
    %427 = vxpose.xlu0.b32.cont [8/16] %v398, 128
    %428 = vxpose.xlu0.b32.cont [9/16] %v401, 128
    %429 = vxpose.xlu0.b32.cont [10/16] %v403, 128
    %430 = vxpose.xlu0.b32.cont [11/16] %v406, 128
    %431 = vxpose.xlu0.b32.cont [12/16] %v408, 128
    %432 = vxpose.xlu0.b32.cont [13/16] %v411, 128
    %433 = vxpose.xlu0.b32.cont [14/16] %v413, 128
    %434 = vxpose.xlu0.b32.cont [15/16] %v416, 128
    %435 = vxpose.xlu0.b32.end [16/16] %v418, 128
    %v436 = vpop.trf.xlu0
    %v437 = vpop.trf.xlu0
    %v438 = vpop.trf.xlu0
    %v439 = vpop.trf.xlu0
    %v440 = vpop.trf.xlu0
    %v441 = vpop.trf.xlu0
    %v442 = vpop.trf.xlu0
    %v443 = vpop.trf.xlu0
    %v444 = vpop.trf.xlu0
    %v445 = vpop.trf.xlu0
    %v446 = vpop.trf.xlu0
    %v447 = vpop.trf.xlu0
    %v448 = vpop.trf.xlu0
    %v449 = vpop.trf.xlu0
    %v450 = vpop.trf.xlu0
    %v451 = vpop.trf.xlu0
    %452 = vst [vmem:[#allocation2] sm:$0x1] %v436
    // Predicated region
    $region30: #{tpu_custom_call.1} parent=1 // pred_check
      _
    $region31: #{tpu_custom_call.1} parent=1 // pred_check_branch
      %454 = sbr.rel (0) target = $region33
    $region32: #{tpu_custom_call.1} parent=1 // pred_region
      %456 = vsyncadd [#allocation3], 0
      %s458 = sshll.u32 [#allocation2], 4
      %s459 = int_to_ptr.vmem [resolvable:$true] %s458
      %s460 = sshll.u32 %s7, 4
      %s461 = int_to_ptr.hbm [resolvable:$true] %s460
      %463 = dma.vmem_to_hbm [thread:$0]  %s459, 16, %s461, [#allocation3]
    $region33: #{tpu_custom_call.1} parent=1 // pred_fallthru
      _
    // Predicated region
    $region34: #{tpu_custom_call.1} parent=1 // pred_check
      _
    $region35: #{tpu_custom_call.1} parent=1 // pred_check_branch
      %465 = sbr.rel (0) target = $region37
    $region36: #{tpu_custom_call.1} parent=1 // pred_region
      %467 = dma.done [#allocation3], 16
    $region37: #{tpu_custom_call.1} parent=1 // pred_fallthru
      _
    %468 = vsyncpa [#allocation3], 1

</llo_original>
